<compile_context>
chip_gen: v6e
topology: v6e:2x2x1
jax: 0.10.0
libtpu: 0.0.40
codegen_flags: <defaults>
</compile_context>

<pallas_src>
import numpy as np
import jax
import jax.numpy as jnp
from jax import lax
from jax.experimental import pallas as pl
from jax.experimental.pallas import tpu as pltpu

LANE = 128


def _round_up(x, m):
    return (x + m - 1) // m * m


# ----------------------------------------------------------------------------
# Pallas kernel: TB batch elements of BilinearAttentionFusion.forward
# ----------------------------------------------------------------------------
def baf_kernel(x_ref, wit_ref, wia_ref, bit_ref, bia_ref,
               ctx_ref, lt_ref, la_ref, lmask_ref, wpool_ref,
               out_ref):
    # x_ref    : (TB, S, Hp) bf16   block of input_hidden_states
    # wit/wia  : (Hp, Dp)    bf16   pre-transposed input-side Linear weights
    # bit/bia  : (1, Dp)     f32    biases
    # ctx_ref  : (1, Dp)     f32    context vector (padded D entries are 0)
    # lt/la    : (Lp, Dp)    bf16   precomputed label transforms
    # lmask    : (1, Lp)     f32    0 for real labels, -1e30 for padding
    # wpool    : (Dp, Hp)    bf16   pre-transposed pool weight (padded rows 0)
    # out_ref  : (1, TB, Hp) f32
    TB, S, Hp = x_ref.shape
    x2 = x_ref[...].reshape(TB * S, Hp)                          # fat M dim

    def mm(a, b):
        return jnp.dot(a, b, preferred_element_type=jnp.float32)

    # Dropout layers are identity (eval mode).
    it = jax.nn.sigmoid(mm(x2, wit_ref[...]) + bit_ref[...])     # (TB*S, Dp) f32
    ia = jax.nn.sigmoid(mm(x2, wia_ref[...]) + bia_ref[...])     # (TB*S, Dp) f32

    # attention = softmax over labels of (context ⊙ ia) @ la^T; labels sit on
    # the lane axis so the reductions are cheap lane reduces.
    s_lhs = (ia * ctx_ref[...]).astype(la_ref.dtype)
    scores = lax.dot_general(s_lhs, la_ref[...],
                             (((1,), (1,)), ((), ())),
                             preferred_element_type=jnp.float32)  # (TB*S, Lp)
    scores = scores + lmask_ref[...]                              # kill padded labels
    m = jnp.max(scores, axis=-1, keepdims=True)
    p = jnp.exp(scores - m)
    attn = p * pl.reciprocal(jnp.sum(p, axis=-1, keepdims=True), approx=True)

    # PyTorch's repeat / permute / 1-wide-bmm chain reduces to
    #   fused[b, d] = sum_s it[b, s, d] * (attn[b] @ lt)[s, d]
    mixed = mm(attn.astype(lt_ref.dtype), lt_ref[...])            # (TB*S, Dp)
    fused = jnp.sum((it * mixed).reshape(TB, S, -1), axis=1)      # (TB, Dp)

    # batched pool matmul (padded Dp rows of wpool are zero)
    out_ref[0] = mm(fused.astype(wpool_ref.dtype), wpool_ref[...])  # (TB, Hp)


# ----------------------------------------------------------------------------
# One-time parameter preparation (transpose / pad / cast)
# ----------------------------------------------------------------------------
def prepare_params(params, compute_dtype=jnp.bfloat16):
    D, H = params["w_it"].shape
    Hp, Dp = _round_up(H, LANE), _round_up(D, LANE)

    def pad2(a, r, c):
        return jnp.pad(a, ((0, r - a.shape[0]), (0, c - a.shape[1])))

    def pack_in(w, b):
        # nn.Linear(H, D) weight (D, H) -> (Hp, Dp) transposed, zero-padded
        wt = pad2(w.T.astype(jnp.float32), Hp, Dp).astype(compute_dtype)
        bp = jnp.pad(b.astype(jnp.float32), (0, Dp - D))[None, :]
        return wt, bp

    w_it, b_it = pack_in(params["w_it"], params["b_it"])
    w_ia, b_ia = pack_in(params["w_ia"], params["b_ia"])
    ctx = jnp.pad(params["context"].astype(jnp.float32), (0, Dp - D))[None, :]
    w_pool = pad2(params["w_pool"].T.astype(jnp.float32), Dp, Hp).astype(compute_dtype)

    return dict(
        H=H, D=D, Hp=Hp, Dp=Dp, compute_dtype=compute_dtype,
        w_it=w_it, b_it=b_it, w_ia=w_ia, b_ia=b_ia,
        ctx=ctx, w_pool=w_pool,
        # raw label-side weights stay unpadded: labels are a runtime input, so
        # the batch-invariant (L, D) activations are computed once per call.
        w_lt=params["w_lt"].astype(jnp.float32), b_lt=params["b_lt"].astype(jnp.float32),
        w_la=params["w_la"].astype(jnp.float32), b_la=params["b_la"].astype(jnp.float32),
    )


# ----------------------------------------------------------------------------
# Wrapper: label-transform hoist, padding, batch-blocked pallas_call
# ----------------------------------------------------------------------------
def bilinear_attention_fusion(prep, input_hidden_states, label_hidden_states):
    H, D, Hp, Dp = prep["H"], prep["D"], prep["Hp"], prep["Dp"]
    cdt = prep["compute_dtype"]

    x = input_hidden_states.astype(jnp.float32)        # (B, S, H)
    labels = label_hidden_states.astype(jnp.float32)   # (L, H)
    B, S, _ = x.shape
    L = labels.shape[0]
    Lp = _round_up(L, LANE)

    # Batch-invariant label transforms: once per call, outside the grid.
    lt = jax.nn.sigmoid(labels @ prep["w_lt"].T + prep["b_lt"])   # (L, D)
    la = jax.nn.sigmoid(labels @ prep["w_la"].T + prep["b_la"])   # (L, D)
    lt = jnp.pad(lt, ((0, Lp - L), (0, Dp - D))).astype(cdt)
    la = jnp.pad(la, ((0, Lp - L), (0, Dp - D))).astype(cdt)
    lmask = jnp.where(jnp.arange(Lp) < L, 0.0, -1e30).astype(jnp.float32)[None, :]

    # Batch blocking: target ~256 MXU rows per step, but keep >= 2 grid
    # programs when B allows so both v7x TensorCores get work.
    TB = max(1, min(B, 256 // max(S, 1)))
    if B >= 2:
        TB = min(TB, -(-B // 2))
    G = -(-B // TB)
    Bp = G * TB

    x_p = jnp.pad(x, ((0, Bp - B), (0, 0), (0, Hp - H))).astype(cdt)

    def shared(a):
        nd = a.ndim
        return pl.BlockSpec(a.shape, lambda g, _nd=nd: (0,) * _nd)

    consts = [prep["w_it"], prep["w_ia"], prep["b_it"], prep["b_ia"],
              prep["ctx"], lt, la, lmask, prep["w_pool"]]

    out = pl.pallas_call(
        baf_kernel,
        out_shape=jax.ShapeDtypeStruct((G, TB, Hp), jnp.float32),
        grid=(G,),
        in_specs=[pl.BlockSpec((TB, S, Hp), lambda g: (g, 0, 0))]
                 + [shared(a) for a in consts],
        out_specs=pl.BlockSpec((1, TB, Hp), lambda g: (g, 0, 0)),
        compiler_params=pltpu.CompilerParams(
            dimension_semantics=("parallel",),
            vmem_limit_bytes=32 * 1024 * 1024),
    )(x_p, *consts)

    return out.reshape(Bp, Hp)[:B, :H]


# ----------------------------------------------------------------------------
# Deterministic parameter init (shapes mirror BilinearAttentionFusion.__init__)
# ----------------------------------------------------------------------------
def init_params(key, hidden_dim, intermediate_dim):
    H, D = hidden_dim, intermediate_dim
    ks = jax.random.split(key, 10)

    def u(k, shape, scale):
        return jax.random.uniform(k, shape, jnp.float32, -scale, scale)

    s_h = 1.0 / np.sqrt(H)   # nn.Linear(H, D) default init range
    s_d = 1.0 / np.sqrt(D)   # nn.Linear(D, H) default init range
    return dict(
        w_it=u(ks[0], (D, H), s_h), b_it=u(ks[1], (D,), s_h),
        w_lt=u(ks[2], (D, H), s_h), b_lt=u(ks[3], (D,), s_h),
        w_ia=u(ks[4], (D, H), s_h), b_ia=u(ks[5], (D,), s_h),
        w_la=u(ks[6], (D, H), s_h), b_la=u(ks[7], (D,), s_h),
        w_pool=u(ks[8], (H, D), s_d),                         # bias=False
        context=jax.random.uniform(ks[9], (D,), jnp.float32, 0.0, 1.0),
    )


# ----------------------------------------------------------------------------
# Pure-JAX reference mirroring the PyTorch ops (incl. the repeat/bmm chain)
# ----------------------------------------------------------------------------
def ref_forward(params, x, labels):
    x = x.astype(jnp.float32)
    labels = labels.astype(jnp.float32)
    B, S, H = x.shape
    L = labels.shape[0]
    D = params["context"].shape[0]
    prec = lax.Precision.HIGHEST

    lab = jnp.broadcast_to(labels[None, :, :], (B, L, H))

    def lin(a, w, b):
        return jnp.einsum("...h,dh->...d", a, w, precision=prec) + b

    it = jax.nn.sigmoid(lin(x, params["w_it"], params["b_it"]))     # (B,S,D)
    lt = jax.nn.sigmoid(lin(lab, params["w_lt"], params["b_lt"]))   # (B,L,D)
    ia = jax.nn.sigmoid(lin(x, params["w_ia"], params["b_ia"]))     # (B,S,D)
    la = jax.nn.sigmoid(lin(lab, params["w_la"], params["b_la"]))   # (B,L,D)

    att = jnp.outer(jnp.ones(S), params["context"])                 # (S, D)
    att = jnp.einsum("bsd,bld->bsl", att[None] * ia, la, precision=prec)
    att = jax.nn.softmax(att, axis=-1)                              # (B,S,L)

    it_p = jnp.transpose(it, (0, 2, 1)).reshape(B * D, 1, S)
    att_r = jnp.repeat(att[:, None, :, :], D, axis=1).reshape(B * D, S, L)
    lt_p = jnp.transpose(lt, (0, 2, 1)).reshape(B * D, L, 1)
    inner = jnp.matmul(att_r, lt_p, precision=prec)                 # (B*D,S,1)
    fused = jnp.matmul(it_p, inner, precision=prec).reshape(B, D)
    out = jnp.einsum("bd,hd->bh", fused, params["w_pool"], precision=prec)
    return out


# ----------------------------------------------------------------------------
if __name__ == "__main__":
    B, S, H, D, L = 2, 8, 32, 32, 4   # batch, seq, hidden_dim, intermediate_dim, num_labels
    key = jax.random.PRNGKey(0)
    k_params, k_x, k_lab = jax.random.split(key, 3)

    params = init_params(k_params, H, D)
    input_hidden_states = jax.random.normal(k_x, (B, S, H), jnp.float32)
    label_hidden_states = jax.random.normal(k_lab, (L, H), jnp.float32)

    prep = prepare_params(params)          # one-time transpose / pad / cast
    fwd = jax.jit(lambda xi, li: bilinear_attention_fusion(prep, xi, li))

    out = fwd(input_hidden_states, label_hidden_states)
    jax.block_until_ready(out)

    ref = ref_forward(params, input_hidden_states, label_hidden_states)
    assert out.shape == (B, H)
    # bf16 MXU inputs (f32 accumulation) vs an f32 HIGHEST-precision reference
    # -> looser tolerance than a pure-f32 run.
    assert jnp.allclose(out, ref, atol=6e-2, rtol=6e-2), "output mismatch vs reference"

    print("KERNEL_OK")
</pallas_src>

<mosaic_0001>
module attributes {stable_mosaic.version = 11 : i64} {
  func.func @baf_kernel(%arg0: i32, %arg1: memref<1x8x128xbf16, #tpu.memory_space<vmem>>, %arg2: memref<128x128xbf16, #tpu.memory_space<vmem>>, %arg3: memref<128x128xbf16, #tpu.memory_space<vmem>>, %arg4: memref<1x128xf32, #tpu.memory_space<vmem>>, %arg5: memref<1x128xf32, #tpu.memory_space<vmem>>, %arg6: memref<1x128xf32, #tpu.memory_space<vmem>>, %arg7: memref<128x128xbf16, #tpu.memory_space<vmem>>, %arg8: memref<128x128xbf16, #tpu.memory_space<vmem>>, %arg9: memref<1x128xf32, #tpu.memory_space<vmem>>, %arg10: memref<128x128xbf16, #tpu.memory_space<vmem>>, %arg11: memref<1x1x128xf32, #tpu.memory_space<vmem>>) attributes {dimension_semantics = [#tpu.dimension_semantics<parallel>], iteration_bounds = array<i64: 2>, scalar_prefetch = 0 : i64, scratch_operands = 0 : i64, tpu.core_type = #tpu.core_type<tc>, window_params = [{transform_indices = @transform_0, window_bounds = array<i64: 1, 8, 128>}, {pipeline_mode = #tpu.pipeline_mode<synchronous>, transform_indices = @transform_1, window_bounds = array<i64: 128, 128>}, {pipeline_mode = #tpu.pipeline_mode<synchronous>, transform_indices = @transform_2, window_bounds = array<i64: 128, 128>}, {pipeline_mode = #tpu.pipeline_mode<synchronous>, transform_indices = @transform_3, window_bounds = array<i64: 1, 128>}, {pipeline_mode = #tpu.pipeline_mode<synchronous>, transform_indices = @transform_4, window_bounds = array<i64: 1, 128>}, {pipeline_mode = #tpu.pipeline_mode<synchronous>, transform_indices = @transform_5, window_bounds = array<i64: 1, 128>}, {pipeline_mode = #tpu.pipeline_mode<synchronous>, transform_indices = @transform_6, window_bounds = array<i64: 128, 128>}, {pipeline_mode = #tpu.pipeline_mode<synchronous>, transform_indices = @transform_7, window_bounds = array<i64: 128, 128>}, {pipeline_mode = #tpu.pipeline_mode<synchronous>, transform_indices = @transform_8, window_bounds = array<i64: 1, 128>}, {pipeline_mode = #tpu.pipeline_mode<synchronous>, transform_indices = @transform_9, window_bounds = array<i64: 128, 128>}, {transform_indices = @transform_10, window_bounds = array<i64: 1, 1, 128>}]} {
    %c0 = arith.constant 0 : index
    %c0_0 = arith.constant 0 : index
    %c0_1 = arith.constant 0 : index
    %0 = vector.load %arg1[%c0, %c0_0, %c0_1] : memref<1x8x128xbf16, #tpu.memory_space<vmem>>, vector<1x8x128xbf16>
    %1 = vector.shape_cast %0 : vector<1x8x128xbf16> to vector<8x128xbf16>
    %c0_2 = arith.constant 0 : index
    %c0_3 = arith.constant 0 : index
    %2 = vector.load %arg2[%c0_2, %c0_3] : memref<128x128xbf16, #tpu.memory_space<vmem>>, vector<128x128xbf16>
    %cst = arith.constant dense<0.000000e+00> : vector<8x128xf32>
    %3 = tpu.matmul %1, %2, %cst {dimension_numbers = #tpu.dot_dimension_numbers<[1], [0], [0], [1], [0, 0, 1, 1], [], []>} : vector<8x128xbf16>, vector<128x128xbf16>, vector<8x128xf32> -> vector<8x128xf32>
    %c0_4 = arith.constant 0 : index
    %c0_5 = arith.constant 0 : index
    %4 = vector.load %arg4[%c0_4, %c0_5] : memref<1x128xf32, #tpu.memory_space<vmem>>, vector<1x128xf32>
    %5 = vector.broadcast %4 : vector<1x128xf32> to vector<8x128xf32>
    %6 = arith.addf %3, %5 : vector<8x128xf32>
    %7 = arith.negf %6 : vector<8x128xf32>
    %8 = math.exp %7 : vector<8x128xf32>
    %cst_6 = arith.constant 1.000000e+00 : f32
    %9 = vector.broadcast %cst_6 : f32 to vector<8x128xf32>
    %10 = arith.addf %9, %8 : vector<8x128xf32>
    %11 = arith.divf %9, %10 : vector<8x128xf32>
    %c0_7 = arith.constant 0 : index
    %c0_8 = arith.constant 0 : index
    %12 = vector.load %arg3[%c0_7, %c0_8] : memref<128x128xbf16, #tpu.memory_space<vmem>>, vector<128x128xbf16>
    %cst_9 = arith.constant dense<0.000000e+00> : vector<8x128xf32>
    %13 = tpu.matmul %1, %12, %cst_9 {dimension_numbers = #tpu.dot_dimension_numbers<[1], [0], [0], [1], [0, 0, 1, 1], [], []>} : vector<8x128xbf16>, vector<128x128xbf16>, vector<8x128xf32> -> vector<8x128xf32>
    %c0_10 = arith.constant 0 : index
    %c0_11 = arith.constant 0 : index
    %14 = vector.load %arg5[%c0_10, %c0_11] : memref<1x128xf32, #tpu.memory_space<vmem>>, vector<1x128xf32>
    %15 = vector.broadcast %14 : vector<1x128xf32> to vector<8x128xf32>
    %16 = arith.addf %13, %15 : vector<8x128xf32>
    %17 = arith.negf %16 : vector<8x128xf32>
    %18 = math.exp %17 : vector<8x128xf32>
    %cst_12 = arith.constant 1.000000e+00 : f32
    %19 = vector.broadcast %cst_12 : f32 to vector<8x128xf32>
    %20 = arith.addf %19, %18 : vector<8x128xf32>
    %21 = arith.divf %19, %20 : vector<8x128xf32>
    %c0_13 = arith.constant 0 : index
    %c0_14 = arith.constant 0 : index
    %22 = vector.load %arg6[%c0_13, %c0_14] : memref<1x128xf32, #tpu.memory_space<vmem>>, vector<1x128xf32>
    %23 = vector.broadcast %22 : vector<1x128xf32> to vector<8x128xf32>
    %24 = arith.mulf %21, %23 : vector<8x128xf32>
    %25 = arith.truncf %24 : vector<8x128xf32> to vector<8x128xbf16>
    %c0_15 = arith.constant 0 : index
    %c0_16 = arith.constant 0 : index
    %26 = vector.load %arg8[%c0_15, %c0_16] : memref<128x128xbf16, #tpu.memory_space<vmem>>, vector<128x128xbf16>
    %cst_17 = arith.constant dense<0.000000e+00> : vector<8x128xf32>
    %27 = tpu.matmul %25, %26, %cst_17 {dimension_numbers = #tpu.dot_dimension_numbers<[1], [1], [0], [0], [0, 0, 1, 0], [], []>} : vector<8x128xbf16>, vector<128x128xbf16>, vector<8x128xf32> -> vector<8x128xf32>
    %c0_18 = arith.constant 0 : index
    %c0_19 = arith.constant 0 : index
    %28 = vector.load %arg9[%c0_18, %c0_19] : memref<1x128xf32, #tpu.memory_space<vmem>>, vector<1x128xf32>
    %29 = vector.broadcast %28 : vector<1x128xf32> to vector<8x128xf32>
    %30 = arith.addf %27, %29 : vector<8x128xf32>
    %cst_20 = arith.constant dense<0xFF800000> : vector<8xf32>
    %31 = vector.multi_reduction <maximumf>, %30, %cst_20 [1] : vector<8x128xf32> to vector<8xf32>
    %32 = vector.shape_cast %31 : vector<8xf32> to vector<8x1xf32>
    %33 = vector.broadcast %32 : vector<8x1xf32> to vector<8x128xf32>
    %34 = arith.subf %30, %33 : vector<8x128xf32>
    %35 = math.exp %34 : vector<8x128xf32>
    %cst_21 = arith.constant dense<0.000000e+00> : vector<8xf32>
    %36 = vector.multi_reduction <add>, %35, %cst_21 [1] : vector<8x128xf32> to vector<8xf32>
    %37 = vector.shape_cast %36 : vector<8xf32> to vector<8x1xf32>
    %38 = tpu.reciprocal %37 {approx = true} : vector<8x1xf32> -> vector<8x1xf32>
    %39 = vector.broadcast %38 : vector<8x1xf32> to vector<8x128xf32>
    %40 = arith.mulf %35, %39 : vector<8x128xf32>
    %41 = arith.truncf %40 : vector<8x128xf32> to vector<8x128xbf16>
    %c0_22 = arith.constant 0 : index
    %c0_23 = arith.constant 0 : index
    %42 = vector.load %arg7[%c0_22, %c0_23] : memref<128x128xbf16, #tpu.memory_space<vmem>>, vector<128x128xbf16>
    %cst_24 = arith.constant dense<0.000000e+00> : vector<8x128xf32>
    %43 = tpu.matmul %41, %42, %cst_24 {dimension_numbers = #tpu.dot_dimension_numbers<[1], [0], [0], [1], [0, 0, 1, 1], [], []>} : vector<8x128xbf16>, vector<128x128xbf16>, vector<8x128xf32> -> vector<8x128xf32>
    %44 = arith.mulf %11, %43 : vector<8x128xf32>
    %45 = vector.shape_cast %44 : vector<8x128xf32> to vector<1x8x128xf32>
    %cst_25 = arith.constant dense<0.000000e+00> : vector<1x128xf32>
    %46 = vector.multi_reduction <add>, %45, %cst_25 [1] : vector<1x8x128xf32> to vector<1x128xf32>
    %47 = arith.truncf %46 : vector<1x128xf32> to vector<1x128xbf16>
    %c0_26 = arith.constant 0 : index
    %c0_27 = arith.constant 0 : index
    %48 = vector.load %arg10[%c0_26, %c0_27] : memref<128x128xbf16, #tpu.memory_space<vmem>>, vector<128x128xbf16>
    %cst_28 = arith.constant dense<0.000000e+00> : vector<1x128xf32>
    %49 = tpu.matmul %47, %48, %cst_28 {dimension_numbers = #tpu.dot_dimension_numbers<[1], [0], [0], [1], [0, 0, 1, 1], [], []>} : vector<1x128xbf16>, vector<128x128xbf16>, vector<1x128xf32> -> vector<1x128xf32>
    %c0_29 = arith.constant 0 : index
    %c0_30 = arith.constant 0 : index
    %c0_31 = arith.constant 0 : index
    %50 = vector.load %arg11[%c0_29, %c0_30, %c0_31] : memref<1x1x128xf32, #tpu.memory_space<vmem>>, vector<1x1x128xf32>
    %51 = vector.shape_cast %50 : vector<1x1x128xf32> to vector<1x128xf32>
    %52 = vector.shape_cast %49 : vector<1x128xf32> to vector<1x1x128xf32>
    tpu.vector_store %arg11[%c0_29, %c0_30, %c0_31], %52 {strides = array<i32>} : memref<1x1x128xf32, #tpu.memory_space<vmem>>, vector<1x1x128xf32>,
    return
  }
  func.func @transform_0(%arg0: i32) -> (i32, i32, i32) {
    %c0_i32 = arith.constant 0 : i32
    %c0_i32_0 = arith.constant 0 : i32
    %c0_i32_1 = arith.constant 0 : i32
    return %arg0, %c0_i32, %c0_i32_0 : i32, i32, i32
  }
  func.func @transform_1(%arg0: i32) -> (i32, i32) {
    %c0_i32 = arith.constant 0 : i32
    %c0_i32_0 = arith.constant 0 : i32
    %c0_i32_1 = arith.constant 0 : i32
    return %c0_i32, %c0_i32_0 : i32, i32
  }
  func.func @transform_2(%arg0: i32) -> (i32, i32) {
    %c0_i32 = arith.constant 0 : i32
    %c0_i32_0 = arith.constant 0 : i32
    %c0_i32_1 = arith.constant 0 : i32
    return %c0_i32, %c0_i32_0 : i32, i32
  }
  func.func @transform_3(%arg0: i32) -> (i32, i32) {
    %c0_i32 = arith.constant 0 : i32
    %c0_i32_0 = arith.constant 0 : i32
    %c0_i32_1 = arith.constant 0 : i32
    return %c0_i32, %c0_i32_0 : i32, i32
  }
  func.func @transform_4(%arg0: i32) -> (i32, i32) {
    %c0_i32 = arith.constant 0 : i32
    %c0_i32_0 = arith.constant 0 : i32
    %c0_i32_1 = arith.constant 0 : i32
    return %c0_i32, %c0_i32_0 : i32, i32
  }
  func.func @transform_5(%arg0: i32) -> (i32, i32) {
    %c0_i32 = arith.constant 0 : i32
    %c0_i32_0 = arith.constant 0 : i32
    %c0_i32_1 = arith.constant 0 : i32
    return %c0_i32, %c0_i32_0 : i32, i32
  }
  func.func @transform_6(%arg0: i32) -> (i32, i32) {
    %c0_i32 = arith.constant 0 : i32
    %c0_i32_0 = arith.constant 0 : i32
    %c0_i32_1 = arith.constant 0 : i32
    return %c0_i32, %c0_i32_0 : i32, i32
  }
  func.func @transform_7(%arg0: i32) -> (i32, i32) {
    %c0_i32 = arith.constant 0 : i32
    %c0_i32_0 = arith.constant 0 : i32
    %c0_i32_1 = arith.constant 0 : i32
    return %c0_i32, %c0_i32_0 : i32, i32
  }
  func.func @transform_8(%arg0: i32) -> (i32, i32) {
    %c0_i32 = arith.constant 0 : i32
    %c0_i32_0 = arith.constant 0 : i32
    %c0_i32_1 = arith.constant 0 : i32
    return %c0_i32, %c0_i32_0 : i32, i32
  }
  func.func @transform_9(%arg0: i32) -> (i32, i32) {
    %c0_i32 = arith.constant 0 : i32
    %c0_i32_0 = arith.constant 0 : i32
    %c0_i32_1 = arith.constant 0 : i32
    return %c0_i32, %c0_i32_0 : i32, i32
  }
  func.func @transform_10(%arg0: i32) -> (i32, i32, i32) {
    %c0_i32 = arith.constant 0 : i32
    %c0_i32_0 = arith.constant 0 : i32
    %c0_i32_1 = arith.constant 0 : i32
    return %arg0, %c0_i32, %c0_i32_0 : i32, i32, i32
  }
}

</mosaic_0001>

<llo_original>
// kernel: _lambda_.1
$region0: #{_lambda_.1}
  #allocation0 [shape = 'u32[]', space=smem, size = 0x4, offset = 0x4, fixed_abs, tag = 'smem constant byte address 0x4 - core index']
  #allocation1 [shape = 'u32[144,128]{1,0:T(1,128)}', space=vmem, size = 0x12000, scoped, tag = 'internal scratch']
  %s0 = inlined_call_operand.vmem [shape: bf16[2,8,128], index: 0, kind: input, shape index: {}]
  %s1 = inlined_call_operand.vmem [shape: bf16[128,128], index: 1, kind: input, shape index: {}]
  %s2 = inlined_call_operand.vmem [shape: bf16[128,128], index: 2, kind: input, shape index: {}]
  %s3 = inlined_call_operand.vmem [shape: f32[1,128], index: 3, kind: input, shape index: {}]
  %s4 = inlined_call_operand.vmem [shape: f32[1,128], index: 4, kind: input, shape index: {}]
  %s5 = inlined_call_operand.vmem [shape: f32[1,128], index: 5, kind: input, shape index: {}]
  %s6 = inlined_call_operand.vmem [shape: bf16[128,128], index: 6, kind: input, shape index: {}]
  %s7 = inlined_call_operand.vmem [shape: bf16[128,128], index: 7, kind: input, shape index: {}]
  %s8 = inlined_call_operand.vmem [shape: f32[1,128], index: 8, kind: input, shape index: {}]
  %s9 = inlined_call_operand.vmem [shape: bf16[128,128], index: 9, kind: input, shape index: {}]
  %s10 = inlined_call_operand.hbm [shape: f32[2,1,128], index: 10, kind: output, shape index: {}]
  %s11 = sld [smem:[#allocation0]]
  $region73: #{_lambda_.1} parent=0
    _
  %s13 = ssub.s32 1, %s11
  %s14 = scalar_select 0, %s13, %s11
  $region1: #{_lambda_.1} parent=0
    #allocation2 [shape = 'u8[1024]{0}', space=vmem, size = 0x400, scoped, tag = 'output window, operand 0']
    #allocation3 [shape = 's32[2]{0}', space=sflag, size = 0x8, scoped, tag = 'scoped memory for _lambda_.1']
    %15 = vsyncpa [#allocation3], 0
    %s16 = scalar_lea.sflag [#allocation3], 1
    %17 = vsyncpa %s16, 0
    loop: start=0, step=1, limit=4
    $region2: #{_lambda_.1} parent=1 // loop_pre_header
      _
    $region3: #{_lambda_.1} parent=1 // loop_header
      %s19 = sphi 0, %s23
      %p20 = scmp.ge.s32.totalorder %s19, 4
      %s29 = sphi 0, %s31
      %s32 = sphi 0, %s29
      %s33 = sphi 0, %s32
      %s49 = sphi 0, %s33
      %s53 = sphi 0, %s53
      %s55 = sphi 0, %s53
      %s56 = sphi 0, %s55
      %s70 = sphi 0, %s56
      %s74 = sphi 0, %s74
      %s76 = sphi 0, %s74
      %s77 = sphi 0, %s76
      %s91 = sphi 0, %s77
      %s95 = sphi 0, %s95
      %s97 = sphi 0, %s95
      %s98 = sphi 0, %s97
      %s112 = sphi 0, %s98
      %s116 = sphi 0, %s116
      %s118 = sphi 0, %s116
      %s119 = sphi 0, %s118
      %s133 = sphi 0, %s119
      %s137 = sphi 0, %s137
      %s139 = sphi 0, %s137
      %s140 = sphi 0, %s139
      %s154 = sphi 0, %s140
      %s158 = sphi 0, %s158
      %s160 = sphi 0, %s158
      %s161 = sphi 0, %s160
      %s175 = sphi 0, %s161
      %s179 = sphi 0, %s179
      %s181 = sphi 0, %s179
      %s182 = sphi 0, %s181
      %s196 = sphi 0, %s182
      %s200 = sphi 0, %s200
      %s202 = sphi 0, %s200
      %s203 = sphi 0, %s202
      %s217 = sphi 0, %s203
      %s221 = sphi 0, %s221
      %s223 = sphi 0, %s221
      %s224 = sphi 0, %s223
      %s238 = sphi 0, %s224
      %s244 = sphi 0, %s246
      %s247 = sphi 0, %s244
      %s248 = sphi 0, %s247
      %s264 = sphi 0, %s248
    $region4: #{_lambda_.1} parent=1 // loop_header_branch
      %22 = sbr.rel (%p20) target = $region8
    $region5: #{_lambda_.1} parent=1 // loop_body
      %s24 = ssub.s32 %s19, 1
      %s25 = ssub.s32 %s19, 2
      %s26 = sadd.s32 %s19, 1
      %s27 = ssub.s32 %s19, %s26
      %p28 = scmp.eq.s32.totalorder %s27, 0
      %s30 = sadd.s32 %s29, 1
      %s31 = scalar_select %p28, %s29, %s30
      %p34 = pneg %p28
      %p35 = scmp.eq.s32.totalorder %s19, 1
      %p36 = por %p34, %p35
      %p37 = scmp.ne.s32.totalorder %s29, %s32
      %p38 = scmp.eq.s32.totalorder %s19, 0
      %p39 = por %p37, %p38
      %p40 = scmp.ne.s32.totalorder %s29, %s32
      %p41 = scmp.eq.s32.totalorder %s24, 1
      %p42 = por %p40, %p41
      %p43 = scmp.ne.s32.totalorder %s32, %s33
      %p44 = scmp.eq.s32.totalorder %s24, 0
      %p45 = por %p43, %p44
      %p46 = scmp.ne.s32.totalorder %s32, %s33
      %p47 = scmp.eq.s32.totalorder %s25, 1
      %p48 = por %p46, %p47
      %p50 = scmp.ne.s32.totalorder %s33, %s49
      %p51 = scmp.eq.s32.totalorder %s25, 0
      %p52 = por %p50, %p51
      %s54 = sadd.s32 %s53, 1
      %p57 = scmp.eq.s32.totalorder %s19, 1
      %p58 = scmp.ne.s32.totalorder %s53, %s55
      %p59 = scmp.eq.s32.totalorder %s19, 0
      %p60 = por %p58, %p59
      %p61 = scmp.ne.s32.totalorder %s53, %s55
      %p62 = scmp.eq.s32.totalorder %s24, 1
      %p63 = por %p61, %p62
      %p64 = scmp.ne.s32.totalorder %s55, %s56
      %p65 = scmp.eq.s32.totalorder %s24, 0
      %p66 = por %p64, %p65
      %p67 = scmp.ne.s32.totalorder %s55, %s56
      %p68 = scmp.eq.s32.totalorder %s25, 1
      %p69 = por %p67, %p68
      %p71 = scmp.ne.s32.totalorder %s56, %s70
      %p72 = scmp.eq.s32.totalorder %s25, 0
      %p73 = por %p71, %p72
      %s75 = sadd.s32 %s74, 1
      %p78 = scmp.eq.s32.totalorder %s19, 1
      %p79 = scmp.ne.s32.totalorder %s74, %s76
      %p80 = scmp.eq.s32.totalorder %s19, 0
      %p81 = por %p79, %p80
      %p82 = scmp.ne.s32.totalorder %s74, %s76
      %p83 = scmp.eq.s32.totalorder %s24, 1
      %p84 = por %p82, %p83
      %p85 = scmp.ne.s32.totalorder %s76, %s77
      %p86 = scmp.eq.s32.totalorder %s24, 0
      %p87 = por %p85, %p86
      %p88 = scmp.ne.s32.totalorder %s76, %s77
      %p89 = scmp.eq.s32.totalorder %s25, 1
      %p90 = por %p88, %p89
      %p92 = scmp.ne.s32.totalorder %s77, %s91
      %p93 = scmp.eq.s32.totalorder %s25, 0
      %p94 = por %p92, %p93
      %s96 = sadd.s32 %s95, 1
      %p99 = scmp.eq.s32.totalorder %s19, 1
      %p100 = scmp.ne.s32.totalorder %s95, %s97
      %p101 = scmp.eq.s32.totalorder %s19, 0
      %p102 = por %p100, %p101
      %p103 = scmp.ne.s32.totalorder %s95, %s97
      %p104 = scmp.eq.s32.totalorder %s24, 1
      %p105 = por %p103, %p104
      %p106 = scmp.ne.s32.totalorder %s97, %s98
      %p107 = scmp.eq.s32.totalorder %s24, 0
      %p108 = por %p106, %p107
      %p109 = scmp.ne.s32.totalorder %s97, %s98
      %p110 = scmp.eq.s32.totalorder %s25, 1
      %p111 = por %p109, %p110
      %p113 = scmp.ne.s32.totalorder %s98, %s112
      %p114 = scmp.eq.s32.totalorder %s25, 0
      %p115 = por %p113, %p114
      %s117 = sadd.s32 %s116, 1
      %p120 = scmp.eq.s32.totalorder %s19, 1
      %p121 = scmp.ne.s32.totalorder %s116, %s118
      %p122 = scmp.eq.s32.totalorder %s19, 0
      %p123 = por %p121, %p122
      %p124 = scmp.ne.s32.totalorder %s116, %s118
      %p125 = scmp.eq.s32.totalorder %s24, 1
      %p126 = por %p124, %p125
      %p127 = scmp.ne.s32.totalorder %s118, %s119
      %p128 = scmp.eq.s32.totalorder %s24, 0
      %p129 = por %p127, %p128
      %p130 = scmp.ne.s32.totalorder %s118, %s119
      %p131 = scmp.eq.s32.totalorder %s25, 1
      %p132 = por %p130, %p131
      %p134 = scmp.ne.s32.totalorder %s119, %s133
      %p135 = scmp.eq.s32.totalorder %s25, 0
      %p136 = por %p134, %p135
      %s138 = sadd.s32 %s137, 1
      %p141 = scmp.eq.s32.totalorder %s19, 1
      %p142 = scmp.ne.s32.totalorder %s137, %s139
      %p143 = scmp.eq.s32.totalorder %s19, 0
      %p144 = por %p142, %p143
      %p145 = scmp.ne.s32.totalorder %s137, %s139
      %p146 = scmp.eq.s32.totalorder %s24, 1
      %p147 = por %p145, %p146
      %p148 = scmp.ne.s32.totalorder %s139, %s140
      %p149 = scmp.eq.s32.totalorder %s24, 0
      %p150 = por %p148, %p149
      %p151 = scmp.ne.s32.totalorder %s139, %s140
      %p152 = scmp.eq.s32.totalorder %s25, 1
      %p153 = por %p151, %p152
      %p155 = scmp.ne.s32.totalorder %s140, %s154
      %p156 = scmp.eq.s32.totalorder %s25, 0
      %p157 = por %p155, %p156
      %s159 = sadd.s32 %s158, 1
      %p162 = scmp.eq.s32.totalorder %s19, 1
      %p163 = scmp.ne.s32.totalorder %s158, %s160
      %p164 = scmp.eq.s32.totalorder %s19, 0
      %p165 = por %p163, %p164
      %p166 = scmp.ne.s32.totalorder %s158, %s160
      %p167 = scmp.eq.s32.totalorder %s24, 1
      %p168 = por %p166, %p167
      %p169 = scmp.ne.s32.totalorder %s160, %s161
      %p170 = scmp.eq.s32.totalorder %s24, 0
      %p171 = por %p169, %p170
      %p172 = scmp.ne.s32.totalorder %s160, %s161
      %p173 = scmp.eq.s32.totalorder %s25, 1
      %p174 = por %p172, %p173
      %p176 = scmp.ne.s32.totalorder %s161, %s175
      %p177 = scmp.eq.s32.totalorder %s25, 0
      %p178 = por %p176, %p177
      %s180 = sadd.s32 %s179, 1
      %p183 = scmp.eq.s32.totalorder %s19, 1
      %p184 = scmp.ne.s32.totalorder %s179, %s181
      %p185 = scmp.eq.s32.totalorder %s19, 0
      %p186 = por %p184, %p185
      %p187 = scmp.ne.s32.totalorder %s179, %s181
      %p188 = scmp.eq.s32.totalorder %s24, 1
      %p189 = por %p187, %p188
      %p190 = scmp.ne.s32.totalorder %s181, %s182
      %p191 = scmp.eq.s32.totalorder %s24, 0
      %p192 = por %p190, %p191
      %p193 = scmp.ne.s32.totalorder %s181, %s182
      %p194 = scmp.eq.s32.totalorder %s25, 1
      %p195 = por %p193, %p194
      %p197 = scmp.ne.s32.totalorder %s182, %s196
      %p198 = scmp.eq.s32.totalorder %s25, 0
      %p199 = por %p197, %p198
      %s201 = sadd.s32 %s200, 1
      %p204 = scmp.eq.s32.totalorder %s19, 1
      %p205 = scmp.ne.s32.totalorder %s200, %s202
      %p206 = scmp.eq.s32.totalorder %s19, 0
      %p207 = por %p205, %p206
      %p208 = scmp.ne.s32.totalorder %s200, %s202
      %p209 = scmp.eq.s32.totalorder %s24, 1
      %p210 = por %p208, %p209
      %p211 = scmp.ne.s32.totalorder %s202, %s203
      %p212 = scmp.eq.s32.totalorder %s24, 0
      %p213 = por %p211, %p212
      %p214 = scmp.ne.s32.totalorder %s202, %s203
      %p215 = scmp.eq.s32.totalorder %s25, 1
      %p216 = por %p214, %p215
      %p218 = scmp.ne.s32.totalorder %s203, %s217
      %p219 = scmp.eq.s32.totalorder %s25, 0
      %p220 = por %p218, %p219
      %s222 = sadd.s32 %s221, 1
      %p225 = scmp.eq.s32.totalorder %s19, 1
      %p226 = scmp.ne.s32.totalorder %s221, %s223
      %p227 = scmp.eq.s32.totalorder %s19, 0
      %p228 = por %p226, %p227
      %p229 = scmp.ne.s32.totalorder %s221, %s223
      %p230 = scmp.eq.s32.totalorder %s24, 1
      %p231 = por %p229, %p230
      %p232 = scmp.ne.s32.totalorder %s223, %s224
      %p233 = scmp.eq.s32.totalorder %s24, 0
      %p234 = por %p232, %p233
      %p235 = scmp.ne.s32.totalorder %s223, %s224
      %p236 = scmp.eq.s32.totalorder %s25, 1
      %p237 = por %p235, %p236
      %p239 = scmp.ne.s32.totalorder %s224, %s238
      %p240 = scmp.eq.s32.totalorder %s25, 0
      %p241 = por %p239, %p240
      %s242 = ssub.s32 %s19, %s26
      %p243 = scmp.eq.s32.totalorder %s242, 0
      %s245 = sadd.s32 %s244, 1
      %s246 = scalar_select %p243, %s244, %s245
      %p249 = pneg %p243
      %p250 = scmp.eq.s32.totalorder %s19, 1
      %p251 = por %p249, %p250
      %p252 = scmp.ne.s32.totalorder %s244, %s247
      %p253 = scmp.eq.s32.totalorder %s19, 0
      %p254 = por %p252, %p253
      %p255 = scmp.ne.s32.totalorder %s244, %s247
      %p256 = scmp.eq.s32.totalorder %s24, 1
      %p257 = por %p255, %p256
      %p258 = scmp.ne.s32.totalorder %s247, %s248
      %p259 = scmp.eq.s32.totalorder %s24, 0
      %p260 = por %p258, %p259
      %p261 = scmp.ne.s32.totalorder %s247, %s248
      %p262 = scmp.eq.s32.totalorder %s25, 1
      %p263 = por %p261, %p262
      %p265 = scmp.ne.s32.totalorder %s248, %s264
      %p266 = scmp.eq.s32.totalorder %s25, 0
      %p267 = por %p265, %p266
      %p268 = scmp.le.s32.totalorder 1, %s19
      %p269 = scmp.lt.s32.totalorder %s19, 3
      %p270 = pnand %p268, %p269
      %p271 = pneg %p270
      // Predicated region
      $region9: #{_lambda_.1} parent=5 // pred_check
        _
      $region10: #{_lambda_.1} parent=5 // pred_check_branch
        %273 = sbr.rel (%p270) target = $region12
      $region11: #{_lambda_.1} parent=5 // pred_region
        %s274 = ssub.s32 %s19, 1
        // Predicated region
        $region13: #{_lambda_.1} parent=11 // pred_check
          %p275 = pneg %p66
        $region14: #{_lambda_.1} parent=11 // pred_check_branch
          %277 = sbr.rel (%p275) target = $region16
        $region15: #{_lambda_.1} parent=11 // pred_region
          _
        $region16: #{_lambda_.1} parent=11 // pred_fallthru
          _
        // Predicated region
        $region17: #{_lambda_.1} parent=11 // pred_check
          %p278 = pneg %p87
        $region18: #{_lambda_.1} parent=11 // pred_check_branch
          %280 = sbr.rel (%p278) target = $region20
        $region19: #{_lambda_.1} parent=11 // pred_region
          _
        $region20: #{_lambda_.1} parent=11 // pred_fallthru
          _
        // Predicated region
        $region21: #{_lambda_.1} parent=11 // pred_check
          %p281 = pneg %p108
        $region22: #{_lambda_.1} parent=11 // pred_check_branch
          %283 = sbr.rel (%p281) target = $region24
        $region23: #{_lambda_.1} parent=11 // pred_region
          _
        $region24: #{_lambda_.1} parent=11 // pred_fallthru
          _
        // Predicated region
        $region25: #{_lambda_.1} parent=11 // pred_check
          %p284 = pneg %p129
        $region26: #{_lambda_.1} parent=11 // pred_check_branch
          %286 = sbr.rel (%p284) target = $region28
        $region27: #{_lambda_.1} parent=11 // pred_region
          _
        $region28: #{_lambda_.1} parent=11 // pred_fallthru
          _
        // Predicated region
        $region29: #{_lambda_.1} parent=11 // pred_check
          %p287 = pneg %p150
        $region30: #{_lambda_.1} parent=11 // pred_check_branch
          %289 = sbr.rel (%p287) target = $region32
        $region31: #{_lambda_.1} parent=11 // pred_region
          _
        $region32: #{_lambda_.1} parent=11 // pred_fallthru
          _
        // Predicated region
        $region33: #{_lambda_.1} parent=11 // pred_check
          %p290 = pneg %p171
        $region34: #{_lambda_.1} parent=11 // pred_check_branch
          %292 = sbr.rel (%p290) target = $region36
        $region35: #{_lambda_.1} parent=11 // pred_region
          _
        $region36: #{_lambda_.1} parent=11 // pred_fallthru
          _
        // Predicated region
        $region37: #{_lambda_.1} parent=11 // pred_check
          %p293 = pneg %p192
        $region38: #{_lambda_.1} parent=11 // pred_check_branch
          %295 = sbr.rel (%p293) target = $region40
        $region39: #{_lambda_.1} parent=11 // pred_region
          _
        $region40: #{_lambda_.1} parent=11 // pred_fallthru
          _
        // Predicated region
        $region41: #{_lambda_.1} parent=11 // pred_check
          %p296 = pneg %p213
        $region42: #{_lambda_.1} parent=11 // pred_check_branch
          %298 = sbr.rel (%p296) target = $region44
        $region43: #{_lambda_.1} parent=11 // pred_region
          _
        $region44: #{_lambda_.1} parent=11 // pred_fallthru
          _
        // Predicated region
        $region45: #{_lambda_.1} parent=11 // pred_check
          %p299 = pneg %p234
        $region46: #{_lambda_.1} parent=11 // pred_check_branch
          %301 = sbr.rel (%p299) target = $region48
        $region47: #{_lambda_.1} parent=11 // pred_region
          _
        $region48: #{_lambda_.1} parent=11 // pred_fallthru
          _
      $region12: #{_lambda_.1} parent=5 // pred_fallthru
        _
      %p302 = scmp.lt.s32.totalorder %s19, 2
      // Predicated region
      $region49: #{_lambda_.1} parent=5 // pred_check
        %p303 = pneg %p302
      $region50: #{_lambda_.1} parent=5 // pred_check_branch
        %305 = sbr.rel (%p303) target = $region52
      $region51: #{_lambda_.1} parent=5 // pred_region
        // Predicated region
        $region53: #{_lambda_.1} parent=51 // pred_check
          %p306 = pneg %p39
        $region54: #{_lambda_.1} parent=51 // pred_check_branch
          %308 = sbr.rel (%p306) target = $region56
        $region55: #{_lambda_.1} parent=51 // pred_region
          %p309 = scmp.lt.s32.totalorder %s19, 1
          %s310 = scalar_select %p309, %s19, 1
          %s311 = smul.addr %s310, 4
          %s312 = scalar_lea.vmem %s0, %s311
        $region56: #{_lambda_.1} parent=51 // pred_fallthru
          _
      $region52: #{_lambda_.1} parent=5 // pred_fallthru
        _
      %p313 = scmp.le.s32.totalorder 1, %s19
      %p314 = scmp.lt.s32.totalorder %s19, 3
      %p315 = pnand %p313, %p314
      %p316 = pneg %p315
      // Predicated region
      $region57: #{_lambda_.1} parent=5 // pred_check
        _
      $region58: #{_lambda_.1} parent=5 // pred_check_branch
        %318 = sbr.rel (%p315) target = $region60
      $region59: #{_lambda_.1} parent=5 // pred_region
        %s319 = ssub.s32 %s19, 1
        %p320 = scmp.lt.s32.totalorder %s24, 1
        %s321 = scalar_select %p320, %s24, 1
        %s322 = smul.addr %s321, 4
        %s323 = scalar_lea.vmem %s0, %s322
        %p324 = pneg %p45
        %p325 = pneg %p42
        %p326 = pneg %p66
        %p327 = pneg %p63
        %p328 = pneg %p87
        %p329 = pneg %p84
        %p330 = pneg %p108
        %p331 = pneg %p105
        %p332 = pneg %p129
        %p333 = pneg %p126
        %p334 = pneg %p150
        %p335 = pneg %p147
        %p336 = pneg %p171
        %p337 = pneg %p168
        %p338 = pneg %p192
        %p339 = pneg %p189
        %p340 = pneg %p213
        %p341 = pneg %p210
        %p342 = pneg %p234
        %p343 = pneg %p231
        %p344 = pneg %p260
        %p345 = pneg %p257
        %s346 = sand.u32 %s247, 1
        %s347 = scalar_lea.sflag [#allocation3], %s346
        %s348 = sand.u32 %s247, 1
        %s349 = scalar_lea.vmem [#allocation2], %s348
        %p350 = scmp.lt.s32.totalorder %s24, 1
        %s351 = scalar_select %p350, %s24, 1
        %s352 = smul.addr %s351, 4
        %s353 = scalar_lea.vmem %s0, %s352
        %v355 = vld [vmem:[%s353] sm:$0xf]
        %v356 = vld [vmem:[%s1] sm:$0xf]
        %v357 = vld [vmem:[%s1 + $0x4] sm:$0xf]
        %v358 = vld [vmem:[%s1 + $0x8] sm:$0xf]
        %v359 = vld [vmem:[%s1 + $0xc] sm:$0xf]
        %v360 = vld [vmem:[%s1 + $0x10] sm:$0xf]
        %v361 = vld [vmem:[%s1 + $0x14] sm:$0xf]
        %v362 = vld [vmem:[%s1 + $0x18] sm:$0xf]
        %v363 = vld [vmem:[%s1 + $0x1c] sm:$0xf]
        %v364 = vld [vmem:[%s1 + $0x20] sm:$0xf]
        %v365 = vld [vmem:[%s1 + $0x24] sm:$0xf]
        %v366 = vld [vmem:[%s1 + $0x28] sm:$0xf]
        %v367 = vld [vmem:[%s1 + $0x2c] sm:$0xf]
        %v368 = vld [vmem:[%s1 + $0x30] sm:$0xf]
        %v369 = vld [vmem:[%s1 + $0x34] sm:$0xf]
        %v370 = vld [vmem:[%s1 + $0x38] sm:$0xf]
        %v371 = vld [vmem:[%s1 + $0x3c] sm:$0xf]
        %v372 = vld [vmem:[%s3] sm:$0x1]
        %v374 = vlaneseq
        %v375 = vshrl.u32 %v374, 7
        %v376 = vsub.s32 0, %v375
        %v377 = vrot.slane %v372, %v376
        %v395 = vunpack.c.l.b16 %v356
        %v396 = vunpack.c.l.b16 %v357
        %v397 = vunpack.c.l.b16 %v358
        %v398 = vunpack.c.l.b16 %v359
        %v399 = vunpack.c.l.b16 %v360
        %v400 = vunpack.c.l.b16 %v361
        %v401 = vunpack.c.l.b16 %v362
        %v402 = vunpack.c.l.b16 %v363
        %v403 = vunpack.c.l.b16 %v364
        %v404 = vunpack.c.l.b16 %v365
        %v405 = vunpack.c.l.b16 %v366
        %v406 = vunpack.c.l.b16 %v367
        %v407 = vunpack.c.l.b16 %v368
        %v408 = vunpack.c.l.b16 %v369
        %v409 = vunpack.c.l.b16 %v370
        %v410 = vunpack.c.l.b16 %v371
        %v411 = vpack.c.b16 %v396, %v395
        %v412 = vpack.c.b16 %v398, %v397
        %v413 = vpack.c.b16 %v400, %v399
        %v414 = vpack.c.b16 %v402, %v401
        %v415 = vpack.c.b16 %v404, %v403
        %v416 = vpack.c.b16 %v406, %v405
        %v417 = vpack.c.b16 %v408, %v407
        %v418 = vpack.c.b16 %v410, %v409
        %427 = vmatprep.subr.bf16.mxu0 0
        %428 = vmatpush1.bf16.msra.mxu0 %v418
        %429 = vmatprep.subr.bf16.mxu0 0
        %430 = vmatpush1.bf16.msra.mxu0 %v417
        %431 = vmatprep.subr.bf16.mxu0 0
        %432 = vmatpush1.bf16.msra.mxu0 %v416
        %433 = vmatprep.subr.bf16.mxu0 0
        %434 = vmatpush1.bf16.msra.mxu0 %v415
        %435 = vmatprep.subr.bf16.mxu0 0
        %436 = vmatpush1.bf16.msra.mxu0 %v414
        %437 = vmatprep.subr.bf16.mxu0 0
        %438 = vmatpush1.bf16.msra.mxu0 %v413
        %439 = vmatprep.subr.bf16.mxu0 0
        %440 = vmatpush1.bf16.msra.mxu0 %v412
        %441 = vmatprep.subr.bf16.mxu0 0
        %442 = vmatpush1.bf16.msra.mxu0 %v411
        %443 = vmatprep.subr.bf16.mxu0 0
        %444 = vmatpush2.bf16.msra.mxu0 0
        %445 = vmatprep.subr.bf16.mxu0 0
        %446 = vmatpush2.bf16.msra.mxu0 0
        %447 = vmatprep.subr.bf16.mxu0 0
        %448 = vmatpush2.bf16.msra.mxu0 0
        %449 = vmatprep.subr.bf16.mxu0 0
        %450 = vmatpush2.bf16.msra.mxu0 0
        %451 = vmatprep.subr.bf16.mxu0 0
        %452 = vmatpush2.bf16.msra.mxu0 0
        %453 = vmatprep.subr.bf16.mxu0 0
        %454 = vmatpush2.bf16.msra.mxu0 0
        %455 = vmatprep.subr.bf16.mxu0 0
        %456 = vmatpush2.bf16.msra.mxu0 0
        %457 = vmatprep.subr.bf16.mxu0 0
        %458 = vmatpush2.bf16.msra.mxu0 0
        %459 = vmatprep.mubr.bf16.mxu0 0
        %460 = vmatmul.mubr.bf16.gmra.mxu0 %v355
        %v461 = vpop.f32.mrf.mxu0
        %v462 = vadd.f32 %v377, %v461
        %v463 = vpop.f32.mrf.mxu0
        %v464 = vpop.f32.mrf.mxu0
        %v465 = vpop.f32.mrf.mxu0
        %466 = vdwg.mxu0
        %v467 = vxor.u32 %v462, 2147483648
        %v468 = vmul.f32 %v467, 1.442695
        %v469 = vpow.pop %v468
        %v470 = vadd.f32 %v469, 1.0
        %v471 = vrcp.pop %v470
        %v472 = vmul.f32 1.0, %v471
        %v473 = vld [vmem:[%s2] sm:$0xf]
        %v474 = vld [vmem:[%s2 + $0x4] sm:$0xf]
        %v475 = vld [vmem:[%s2 + $0x8] sm:$0xf]
        %v476 = vld [vmem:[%s2 + $0xc] sm:$0xf]
        %v477 = vld [vmem:[%s2 + $0x10] sm:$0xf]
        %v478 = vld [vmem:[%s2 + $0x14] sm:$0xf]
        %v479 = vld [vmem:[%s2 + $0x18] sm:$0xf]
        %v480 = vld [vmem:[%s2 + $0x1c] sm:$0xf]
        %v481 = vld [vmem:[%s2 + $0x20] sm:$0xf]
        %v482 = vld [vmem:[%s2 + $0x24] sm:$0xf]
        %v483 = vld [vmem:[%s2 + $0x28] sm:$0xf]
        %v484 = vld [vmem:[%s2 + $0x2c] sm:$0xf]
        %v485 = vld [vmem:[%s2 + $0x30] sm:$0xf]
        %v486 = vld [vmem:[%s2 + $0x34] sm:$0xf]
        %v487 = vld [vmem:[%s2 + $0x38] sm:$0xf]
        %v488 = vld [vmem:[%s2 + $0x3c] sm:$0xf]
        %v489 = vld [vmem:[%s4] sm:$0x1]
        %v491 = vlaneseq
        %v492 = vshrl.u32 %v491, 7
        %v493 = vsub.s32 0, %v492
        %v494 = vrot.slane %v489, %v493
        %v512 = vunpack.c.l.b16 %v473
        %v513 = vunpack.c.l.b16 %v474
        %v514 = vunpack.c.l.b16 %v475
        %v515 = vunpack.c.l.b16 %v476
        %v516 = vunpack.c.l.b16 %v477
        %v517 = vunpack.c.l.b16 %v478
        %v518 = vunpack.c.l.b16 %v479
        %v519 = vunpack.c.l.b16 %v480
        %v520 = vunpack.c.l.b16 %v481
        %v521 = vunpack.c.l.b16 %v482
        %v522 = vunpack.c.l.b16 %v483
        %v523 = vunpack.c.l.b16 %v484
        %v524 = vunpack.c.l.b16 %v485
        %v525 = vunpack.c.l.b16 %v486
        %v526 = vunpack.c.l.b16 %v487
        %v527 = vunpack.c.l.b16 %v488
        %v528 = vpack.c.b16 %v513, %v512
        %v529 = vpack.c.b16 %v515, %v514
        %v530 = vpack.c.b16 %v517, %v516
        %v531 = vpack.c.b16 %v519, %v518
        %v532 = vpack.c.b16 %v521, %v520
        %v533 = vpack.c.b16 %v523, %v522
        %v534 = vpack.c.b16 %v525, %v524
        %v535 = vpack.c.b16 %v527, %v526
        %544 = vmatprep.subr.bf16.mxu0 0
        %545 = vmatpush1.bf16.msra.mxu0 %v535
        %546 = vmatprep.subr.bf16.mxu0 0
        %547 = vmatpush1.bf16.msra.mxu0 %v534
        %548 = vmatprep.subr.bf16.mxu0 0
        %549 = vmatpush1.bf16.msra.mxu0 %v533
        %550 = vmatprep.subr.bf16.mxu0 0
        %551 = vmatpush1.bf16.msra.mxu0 %v532
        %552 = vmatprep.subr.bf16.mxu0 0
        %553 = vmatpush1.bf16.msra.mxu0 %v531
        %554 = vmatprep.subr.bf16.mxu0 0
        %555 = vmatpush1.bf16.msra.mxu0 %v530
        %556 = vmatprep.subr.bf16.mxu0 0
        %557 = vmatpush1.bf16.msra.mxu0 %v529
        %558 = vmatprep.subr.bf16.mxu0 0
        %559 = vmatpush1.bf16.msra.mxu0 %v528
        %560 = vmatprep.subr.bf16.mxu0 0
        %561 = vmatpush2.bf16.msra.mxu0 0
        %562 = vmatprep.subr.bf16.mxu0 0
        %563 = vmatpush2.bf16.msra.mxu0 0
        %564 = vmatprep.subr.bf16.mxu0 0
        %565 = vmatpush2.bf16.msra.mxu0 0
        %566 = vmatprep.subr.bf16.mxu0 0
        %567 = vmatpush2.bf16.msra.mxu0 0
        %568 = vmatprep.subr.bf16.mxu0 0
        %569 = vmatpush2.bf16.msra.mxu0 0
        %570 = vmatprep.subr.bf16.mxu0 0
        %571 = vmatpush2.bf16.msra.mxu0 0
        %572 = vmatprep.subr.bf16.mxu0 0
        %573 = vmatpush2.bf16.msra.mxu0 0
        %574 = vmatprep.subr.bf16.mxu0 0
        %575 = vmatpush2.bf16.msra.mxu0 0
        %576 = vmatprep.mubr.bf16.mxu0 0
        %577 = vmatmul.mubr.bf16.gmra.mxu0 %v355
        %v578 = vpop.f32.mrf.mxu0
        %v579 = vadd.f32 %v494, %v578
        %v580 = vpop.f32.mrf.mxu0
        %v581 = vpop.f32.mrf.mxu0
        %v582 = vpop.f32.mrf.mxu0
        %583 = vdwg.mxu0
        %v584 = vxor.u32 %v579, 2147483648
        %v585 = vmul.f32 %v584, 1.442695
        %v586 = vpow.pop %v585
        %v587 = vadd.f32 %v586, 1.0
        %v588 = vrcp.pop %v587
        %v589 = vmul.f32 1.0, %v588
        %v590 = vld [vmem:[%s5] sm:$0x1]
        %v592 = vlaneseq
        %v593 = vshrl.u32 %v592, 7
        %v594 = vsub.s32 0, %v593
        %v595 = vrot.slane %v590, %v594
        %v597 = vmul.f32 %v589, %v595
        %v598 = vpack.c.bf16 %v597, %v597
        %v599 = vld [vmem:[%s7] sm:$0xf]
        %v600 = vld [vmem:[%s7 + $0x4] sm:$0xf]
        %v601 = vld [vmem:[%s7 + $0x8] sm:$0xf]
        %v602 = vld [vmem:[%s7 + $0xc] sm:$0xf]
        %v603 = vld [vmem:[%s7 + $0x10] sm:$0xf]
        %v604 = vld [vmem:[%s7 + $0x14] sm:$0xf]
        %v605 = vld [vmem:[%s7 + $0x18] sm:$0xf]
        %v606 = vld [vmem:[%s7 + $0x1c] sm:$0xf]
        %v607 = vld [vmem:[%s7 + $0x20] sm:$0xf]
        %v608 = vld [vmem:[%s7 + $0x24] sm:$0xf]
        %v609 = vld [vmem:[%s7 + $0x28] sm:$0xf]
        %v610 = vld [vmem:[%s7 + $0x2c] sm:$0xf]
        %v611 = vld [vmem:[%s7 + $0x30] sm:$0xf]
        %v612 = vld [vmem:[%s7 + $0x34] sm:$0xf]
        %v613 = vld [vmem:[%s7 + $0x38] sm:$0xf]
        %v614 = vld [vmem:[%s7 + $0x3c] sm:$0xf]
        %v615 = vld [vmem:[%s8] sm:$0x1]
        %v617 = vlaneseq
        %v618 = vshrl.u32 %v617, 7
        %v619 = vsub.s32 0, %v618
        %v620 = vrot.slane %v615, %v619
        %v638 = vunpack.c.l.b16 %v599
        %v639 = vunpack.c.l.b16 %v600
        %v640 = vunpack.c.l.b16 %v601
        %v641 = vunpack.c.l.b16 %v602
        %v642 = vunpack.c.l.b16 %v603
        %v643 = vunpack.c.l.b16 %v604
        %v644 = vunpack.c.l.b16 %v605
        %v645 = vunpack.c.l.b16 %v606
        %v646 = vunpack.c.l.b16 %v607
        %v647 = vunpack.c.l.b16 %v608
        %v648 = vunpack.c.l.b16 %v609
        %v649 = vunpack.c.l.b16 %v610
        %v650 = vunpack.c.l.b16 %v611
        %v651 = vunpack.c.l.b16 %v612
        %v652 = vunpack.c.l.b16 %v613
        %v653 = vunpack.c.l.b16 %v614
        %v654 = vpack.c.b16 %v639, %v638
        %v655 = vpack.c.b16 %v641, %v640
        %v656 = vpack.c.b16 %v643, %v642
        %v657 = vpack.c.b16 %v645, %v644
        %v658 = vpack.c.b16 %v647, %v646
        %v659 = vpack.c.b16 %v649, %v648
        %v660 = vpack.c.b16 %v651, %v650
        %v661 = vpack.c.b16 %v653, %v652
        %670 = vmatprep.subr.bf16.mxu0 0
        %671 = vmatpush1.bf16.xpose.msra.mxu0 %v661
        %672 = vmatprep.subr.bf16.mxu0 0
        %673 = vmatpush1.bf16.xpose.msra.mxu0 %v660
        %674 = vmatprep.subr.bf16.mxu0 0
        %675 = vmatpush1.bf16.xpose.msra.mxu0 %v659
        %676 = vmatprep.subr.bf16.mxu0 0
        %677 = vmatpush1.bf16.xpose.msra.mxu0 %v658
        %678 = vmatprep.subr.bf16.mxu0 0
        %679 = vmatpush1.bf16.xpose.msra.mxu0 %v657
        %680 = vmatprep.subr.bf16.mxu0 0
        %681 = vmatpush1.bf16.xpose.msra.mxu0 %v656
        %682 = vmatprep.subr.bf16.mxu0 0
        %683 = vmatpush1.bf16.xpose.msra.mxu0 %v655
        %684 = vmatprep.subr.bf16.mxu0 0
        %685 = vmatpush1.bf16.xpose.msra.mxu0 %v654
        %686 = vmatprep.subr.bf16.mxu0 0
        %687 = vmatpush2.bf16.xpose.msra.mxu0 0
        %688 = vmatprep.subr.bf16.mxu0 0
        %689 = vmatpush2.bf16.xpose.msra.mxu0 0
        %690 = vmatprep.subr.bf16.mxu0 0
        %691 = vmatpush2.bf16.xpose.msra.mxu0 0
        %692 = vmatprep.subr.bf16.mxu0 0
        %693 = vmatpush2.bf16.xpose.msra.mxu0 0
        %694 = vmatprep.subr.bf16.mxu0 0
        %695 = vmatpush2.bf16.xpose.msra.mxu0 0
        %696 = vmatprep.subr.bf16.mxu0 0
        %697 = vmatpush2.bf16.xpose.msra.mxu0 0
        %698 = vmatprep.subr.bf16.mxu0 0
        %699 = vmatpush2.bf16.xpose.msra.mxu0 0
        %700 = vmatprep.subr.bf16.mxu0 0
        %701 = vmatpush2.bf16.xpose.msra.mxu0 0
        %702 = vmatprep.mubr.bf16.mxu0 0
        %703 = vmatmul.mubr.bf16.gmra.mxu0 %v598
        %v704 = vpop.f32.mrf.mxu0
        %v705 = vadd.f32 %v620, %v704
        %v706 = vpop.f32.mrf.mxu0
        %v707 = vpop.f32.mrf.mxu0
        %v708 = vpop.f32.mrf.mxu0
        %709 = vdwg.mxu0
        %710 = vmax.xlane.f32.xlu0 %v705
        %v711 = vpop.xlane.xlu0 %710
        %v712 = vsub.f32 %v705, %v711
        %v713 = vmul.f32 %v712, 1.442695
        %v714 = vpow.pop %v713
        %715 = vadd.xlane.f32.xlu0 %v714
        %v716 = vpop.xlane.xlu0 %715
        %v717 = vrcp.pop %v716
        %v718 = vmul.f32 %v714, %v717
        %v719 = vpack.c.bf16 %v718, %v718
        %v720 = vld [vmem:[%s6] sm:$0xf]
        %v721 = vld [vmem:[%s6 + $0x4] sm:$0xf]
        %v722 = vld [vmem:[%s6 + $0x8] sm:$0xf]
        %v723 = vld [vmem:[%s6 + $0xc] sm:$0xf]
        %v724 = vld [vmem:[%s6 + $0x10] sm:$0xf]
        %v725 = vld [vmem:[%s6 + $0x14] sm:$0xf]
        %v726 = vld [vmem:[%s6 + $0x18] sm:$0xf]
        %v727 = vld [vmem:[%s6 + $0x1c] sm:$0xf]
        %v728 = vld [vmem:[%s6 + $0x20] sm:$0xf]
        %v729 = vld [vmem:[%s6 + $0x24] sm:$0xf]
        %v730 = vld [vmem:[%s6 + $0x28] sm:$0xf]
        %v731 = vld [vmem:[%s6 + $0x2c] sm:$0xf]
        %v732 = vld [vmem:[%s6 + $0x30] sm:$0xf]
        %v733 = vld [vmem:[%s6 + $0x34] sm:$0xf]
        %v734 = vld [vmem:[%s6 + $0x38] sm:$0xf]
        %v735 = vld [vmem:[%s6 + $0x3c] sm:$0xf]
        %v752 = vunpack.c.l.b16 %v720
        %v753 = vunpack.c.l.b16 %v721
        %v754 = vunpack.c.l.b16 %v722
        %v755 = vunpack.c.l.b16 %v723
        %v756 = vunpack.c.l.b16 %v724
        %v757 = vunpack.c.l.b16 %v725
        %v758 = vunpack.c.l.b16 %v726
        %v759 = vunpack.c.l.b16 %v727
        %v760 = vunpack.c.l.b16 %v728
        %v761 = vunpack.c.l.b16 %v729
        %v762 = vunpack.c.l.b16 %v730
        %v763 = vunpack.c.l.b16 %v731
        %v764 = vunpack.c.l.b16 %v732
        %v765 = vunpack.c.l.b16 %v733
        %v766 = vunpack.c.l.b16 %v734
        %v767 = vunpack.c.l.b16 %v735
        %v768 = vpack.c.b16 %v753, %v752
        %v769 = vpack.c.b16 %v755, %v754
        %v770 = vpack.c.b16 %v757, %v756
        %v771 = vpack.c.b16 %v759, %v758
        %v772 = vpack.c.b16 %v761, %v760
        %v773 = vpack.c.b16 %v763, %v762
        %v774 = vpack.c.b16 %v765, %v764
        %v775 = vpack.c.b16 %v767, %v766
        %784 = vmatprep.subr.bf16.mxu0 0
        %785 = vmatpush1.bf16.msra.mxu0 %v775
        %786 = vmatprep.subr.bf16.mxu0 0
        %787 = vmatpush1.bf16.msra.mxu0 %v774
        %788 = vmatprep.subr.bf16.mxu0 0
        %789 = vmatpush1.bf16.msra.mxu0 %v773
        %790 = vmatprep.subr.bf16.mxu0 0
        %791 = vmatpush1.bf16.msra.mxu0 %v772
        %792 = vmatprep.subr.bf16.mxu0 0
        %793 = vmatpush1.bf16.msra.mxu0 %v771
        %794 = vmatprep.subr.bf16.mxu0 0
        %795 = vmatpush1.bf16.msra.mxu0 %v770
        %796 = vmatprep.subr.bf16.mxu0 0
        %797 = vmatpush1.bf16.msra.mxu0 %v769
        %798 = vmatprep.subr.bf16.mxu0 0
        %799 = vmatpush1.bf16.msra.mxu0 %v768
        %800 = vmatprep.subr.bf16.mxu0 0
        %801 = vmatpush2.bf16.msra.mxu0 0
        %802 = vmatprep.subr.bf16.mxu0 0
        %803 = vmatpush2.bf16.msra.mxu0 0
        %804 = vmatprep.subr.bf16.mxu0 0
        %805 = vmatpush2.bf16.msra.mxu0 0
        %806 = vmatprep.subr.bf16.mxu0 0
        %807 = vmatpush2.bf16.msra.mxu0 0
        %808 = vmatprep.subr.bf16.mxu0 0
        %809 = vmatpush2.bf16.msra.mxu0 0
        %810 = vmatprep.subr.bf16.mxu0 0
        %811 = vmatpush2.bf16.msra.mxu0 0
        %812 = vmatprep.subr.bf16.mxu0 0
        %813 = vmatpush2.bf16.msra.mxu0 0
        %814 = vmatprep.subr.bf16.mxu0 0
        %815 = vmatpush2.bf16.msra.mxu0 0
        %816 = vmatprep.mubr.bf16.mxu0 0
        %817 = vmatmul.mubr.bf16.gmra.mxu0 %v719
        %v818 = vpop.f32.mrf.mxu0
        %v819 = vadd.f32 0.0, %v818
        %v820 = vpop.f32.mrf.mxu0
        %v821 = vpop.f32.mrf.mxu0
        %v822 = vpop.f32.mrf.mxu0
        %823 = vdwg.mxu0
        %v824 = vmul.f32 %v472, %v819
        %v825 = vrot.slane %v824, 4
        %v826 = vadd.f32 %v824, %v825
        %v827 = vrot.slane %v826, 2
        %v828 = vadd.f32 %v826, %v827
        %v829 = vrot.slane %v828, 1
        %v830 = vadd.f32 %v828, %v829
        %v831 = vpack.c.bf16 %v830, %v830
        %v832 = vld [vmem:[%s9] sm:$0xf]
        %v833 = vld [vmem:[%s9 + $0x4] sm:$0xf]
        %v834 = vld [vmem:[%s9 + $0x8] sm:$0xf]
        %v835 = vld [vmem:[%s9 + $0xc] sm:$0xf]
        %v836 = vld [vmem:[%s9 + $0x10] sm:$0xf]
        %v837 = vld [vmem:[%s9 + $0x14] sm:$0xf]
        %v838 = vld [vmem:[%s9 + $0x18] sm:$0xf]
        %v839 = vld [vmem:[%s9 + $0x1c] sm:$0xf]
        %v840 = vld [vmem:[%s9 + $0x20] sm:$0xf]
        %v841 = vld [vmem:[%s9 + $0x24] sm:$0xf]
        %v842 = vld [vmem:[%s9 + $0x28] sm:$0xf]
        %v843 = vld [vmem:[%s9 + $0x2c] sm:$0xf]
        %v844 = vld [vmem:[%s9 + $0x30] sm:$0xf]
        %v845 = vld [vmem:[%s9 + $0x34] sm:$0xf]
        %v846 = vld [vmem:[%s9 + $0x38] sm:$0xf]
        %v847 = vld [vmem:[%s9 + $0x3c] sm:$0xf]
        %v864 = vunpack.c.l.b16 %v832
        %v865 = vunpack.c.l.b16 %v833
        %v866 = vunpack.c.l.b16 %v834
        %v867 = vunpack.c.l.b16 %v835
        %v868 = vunpack.c.l.b16 %v836
        %v869 = vunpack.c.l.b16 %v837
        %v870 = vunpack.c.l.b16 %v838
        %v871 = vunpack.c.l.b16 %v839
        %v872 = vunpack.c.l.b16 %v840
        %v873 = vunpack.c.l.b16 %v841
        %v874 = vunpack.c.l.b16 %v842
        %v875 = vunpack.c.l.b16 %v843
        %v876 = vunpack.c.l.b16 %v844
        %v877 = vunpack.c.l.b16 %v845
        %v878 = vunpack.c.l.b16 %v846
        %v879 = vunpack.c.l.b16 %v847
        %v880 = vpack.c.b16 %v865, %v864
        %v881 = vpack.c.b16 %v867, %v866
        %v882 = vpack.c.b16 %v869, %v868
        %v883 = vpack.c.b16 %v871, %v870
        %v884 = vpack.c.b16 %v873, %v872
        %v885 = vpack.c.b16 %v875, %v874
        %v886 = vpack.c.b16 %v877, %v876
        %v887 = vpack.c.b16 %v879, %v878
        %896 = vmatprep.subr.bf16.mxu0 0
        %897 = vmatpush1.bf16.msra.mxu0 %v887
        %898 = vmatprep.subr.bf16.mxu0 0
        %899 = vmatpush1.bf16.msra.mxu0 %v886
        %900 = vmatprep.subr.bf16.mxu0 0
        %901 = vmatpush1.bf16.msra.mxu0 %v885
        %902 = vmatprep.subr.bf16.mxu0 0
        %903 = vmatpush1.bf16.msra.mxu0 %v884
        %904 = vmatprep.subr.bf16.mxu0 0
        %905 = vmatpush1.bf16.msra.mxu0 %v883
        %906 = vmatprep.subr.bf16.mxu0 0
        %907 = vmatpush1.bf16.msra.mxu0 %v882
        %908 = vmatprep.subr.bf16.mxu0 0
        %909 = vmatpush1.bf16.msra.mxu0 %v881
        %910 = vmatprep.subr.bf16.mxu0 0
        %911 = vmatpush1.bf16.msra.mxu0 %v880
        %912 = vmatprep.subr.bf16.mxu0 0
        %913 = vmatpush2.bf16.msra.mxu0 0
        %914 = vmatprep.subr.bf16.mxu0 0
        %915 = vmatpush2.bf16.msra.mxu0 0
        %916 = vmatprep.subr.bf16.mxu0 0
        %917 = vmatpush2.bf16.msra.mxu0 0
        %918 = vmatprep.subr.bf16.mxu0 0
        %919 = vmatpush2.bf16.msra.mxu0 0
        %920 = vmatprep.subr.bf16.mxu0 0
        %921 = vmatpush2.bf16.msra.mxu0 0
        %922 = vmatprep.subr.bf16.mxu0 0
        %923 = vmatpush2.bf16.msra.mxu0 0
        %924 = vmatprep.subr.bf16.mxu0 0
        %925 = vmatpush2.bf16.msra.mxu0 0
        %926 = vmatprep.subr.bf16.mxu0 0
        %927 = vmatpush2.bf16.msra.mxu0 0
        %928 = vmatprep.mubr.bf16.mxu0 0
        %929 = vmatmul.mubr.bf16.gmra.mxu0 %v831
        %v930 = vpop.f32.mrf.mxu0
        %v931 = vadd.f32 0.0, %v930
        %v932 = vpop.f32.mrf.mxu0
        %v933 = vpop.f32.mrf.mxu0
        %v934 = vpop.f32.mrf.mxu0
        %935 = vdwg.mxu0
        %936 = vst [vmem:[%s349] sm:$0x1] %v931
        %s937 = sand.u32 %s247, 1
        %s938 = scalar_lea.sflag [#allocation3], %s937
        %s939 = sand.u32 %s247, 1
        %s940 = scalar_lea.vmem [#allocation2], %s939
        // Predicated region
        $region61: #{_lambda_.1} parent=59 // pred_check
          %p941 = pneg %p257
        $region62: #{_lambda_.1} parent=59 // pred_check_branch
          %943 = sbr.rel (%p941) target = $region64
        $region63: #{_lambda_.1} parent=59 // pred_region
          %s945 = ssub.s32 16, 16
          %946 = vsyncadd %s938, %s945
          %s947 = smul.addr %s24, 16
          %s948 = scalar_lea.hbm %s10, %s947
          %s950 = sshll.u32 %s940, 4
          %s951 = int_to_ptr.vmem [resolvable:$true] %s950
          %953 = dma.vmem_to_hbm [thread:$0]  %s951, 16, %s948, %s938
        $region64: #{_lambda_.1} parent=59 // pred_fallthru
          _
      $region60: #{_lambda_.1} parent=5 // pred_fallthru
        _
      %p954 = scmp.le.s32.totalorder 2, %s19
      // Predicated region
      $region65: #{_lambda_.1} parent=5 // pred_check
        %p955 = pneg %p954
      $region66: #{_lambda_.1} parent=5 // pred_check_branch
        %957 = sbr.rel (%p955) target = $region68
      $region67: #{_lambda_.1} parent=5 // pred_region
        %s958 = ssub.s32 %s19, 2
        // Predicated region
        $region69: #{_lambda_.1} parent=67 // pred_check
          %p959 = pneg %p263
        $region70: #{_lambda_.1} parent=67 // pred_check_branch
          %961 = sbr.rel (%p959) target = $region72
        $region71: #{_lambda_.1} parent=67 // pred_region
          %s962 = sand.u32 %s248, 1
          %s963 = scalar_lea.sflag [#allocation3], %s962
          %s964 = sand.u32 %s248, 1
          %s965 = scalar_lea.vmem [#allocation2], %s964
          %966 = dma.done %s963, 16
        $region72: #{_lambda_.1} parent=67 // pred_fallthru
          _
      $region68: #{_lambda_.1} parent=5 // pred_fallthru
        _
    $region6: #{_lambda_.1} parent=1 // loop_footer
      %s23 = sadd.s32 1, %s19
    $region7: #{_lambda_.1} parent=1 // loop_footer_branch
      %18 = sbr.rel target = $region3
    $region8: #{_lambda_.1} parent=1 // loop_exit
      _
    %967 = vsyncpa [#allocation3], 1
    %s968 = scalar_lea.sflag [#allocation3], 1
    %969 = vsyncpa %s968, 1

</llo_original>
